<compile_context>
chip_gen: v6e
topology: v6e:2x2x1
jax: 0.10.0
libtpu: 0.0.40
codegen_flags: <defaults>
</compile_context>

<pallas_src>
import functools

import jax
import jax.numpy as jnp
import numpy as np
from jax import lax
from jax.experimental import pallas as pl
from jax.experimental.pallas import tpu as pltpu


# --------------------------------------------------------------------------------------
# Kernel
# --------------------------------------------------------------------------------------
def _conv1d_kernel(*refs, L, ks, pad_l, pad_zero, has_bias):
    """One grid step = (TB batch rows) x (one tile of output filters).

    refs (in order):
      x_ref : (TB, C, L)      unpadded input rows, native dtype
      w_ref : (TF, ks*C)      filter tile, w2[f, k*C + c] = weight[f, c, k]  (never sliced)
      b_ref : (TF, 1) f32     only when has_bias
      o_ref : (TB, TF, L)     output tile
    """
    if has_bias:
        x_ref, w_ref, b_ref, o_ref = refs
    else:
        x_ref, w_ref, o_ref = refs

    TB, C, _ = x_ref.shape
    TF = w_ref.shape[0]

    w = w_ref[...]                                       # (TF, ks*C), native dtype
    if has_bias:
        # Hoist the lane broadcast once (JAX does not CSE broadcasts inside the row loop).
        bias_full = jnp.broadcast_to(b_ref[...], (TF, L)).astype(jnp.float32)

    for b in range(TB):                                  # TB is small & static -> unrolled
        x = x_ref[b]                                     # (C, L)

        # ---- synthesize the module's padding as shifted taps, directly in VMEM ----
        taps = []
        for k in range(ks):                              # ks is small & static -> unrolled
            s = k - pad_l                                # tap k reads x[:, l + s]
            if s == 0:
                tap = x
            elif s < 0:                                  # zero left pad (ConstantPad1d)
                left = min(-s, L)
                if left == L:
                    tap = jnp.zeros((C, L), x.dtype)
                else:
                    tap = jnp.concatenate(
                        [jnp.zeros((C, left), x.dtype), x[:, :L - left]], axis=-1)
            else:                                        # right pad: zeros or edge replicate
                right = min(s, L)
                if pad_zero:
                    fill = jnp.zeros((C, right), x.dtype)
                else:                                    # ReplicationPad1d((0, ks-1))
                    fill = jnp.broadcast_to(x[:, L - 1:L], (C, right))
                tap = fill if right == L else jnp.concatenate([x[:, right:], fill], axis=-1)
            taps.append(tap)
        xs = jnp.concatenate(taps, axis=0)               # (ks*C, L) im2col tap stack

        # ---- single MXU matmul, contraction depth K = ks*C, f32 accumulation ----
        y = jnp.dot(w, xs, preferred_element_type=jnp.float32)   # (TF, L)
        if has_bias:
            y = y + bias_full
        o_ref[b] = y.astype(o_ref.dtype)


# --------------------------------------------------------------------------------------
# Wrapper
# --------------------------------------------------------------------------------------
def _vmem_capacity_bytes(default=64 * 1024 * 1024):
    """Physical VMEM per core; conservative (v7x-sized) fallback if the query fails."""
    try:
        info = pltpu.get_tpu_info()
        for name in ("vmem_capacity_bytes", "vmem_bytes", "vmem_size_bytes"):
            v = getattr(info, name, None)
            if isinstance(v, int) and v > 0:
                return v
    except Exception:
        pass
    return default


def _pick_tiles(N, C, L, F, ks, itemsize, budget):
    """Choose (TB, TF) so double-buffered blocks + in-kernel intermediates fit `budget`."""
    K = ks * C

    def blk_bytes(tb, tf):
        x_blk = tb * C * L * itemsize
        w_blk = tf * K * itemsize
        b_blk = tf * 4
        o_blk = tb * tf * L * itemsize
        pipeline = 2 * (x_blk + w_blk + b_blk + o_blk)            # double-buffered DMA blocks
        # per-row in-kernel intermediates: input row, tap list + stacked copy, f32 result, cast
        scratch = (C * L + 2 * K * L + tf * L) * itemsize + tf * L * 4
        return pipeline + scratch

    # Filter tile: prefer whole F (weights are small); otherwise multiples of 8 (sublane rule),
    # largest first (256/128-aligned tiles fill the MXU on v6e/v7x / v5e).
    tf_cands = [F] + [d for d in (512, 256, 128, 64, 32, 16, 8) if d < F and F % d == 0]
    TF = next((tf for tf in tf_cands if blk_bytes(1, tf) <= budget), tf_cands[-1])

    # Batch tile: largest divisor of N (capped at 8 to bound the unrolled per-row loop) that fits.
    tb_cands = [d for d in range(min(N, 8), 0, -1) if N % d == 0]
    TB = next((tb for tb in tb_cands if blk_bytes(tb, TF) <= budget), 1)
    return TB, TF


def conv1d_new_padding(x, weight, bias=None, *, stride=1, pad_zero=True):
    """Pallas TPU forward pass of Conv1d_new_padding.

    x      : (N, C, L)
    weight : (F, C, ks)   (PyTorch nn.Conv1d weight layout)
    bias   : (F,) or None (module default bias=False)
    """
    N, C, L = x.shape
    F, Cw, ks = weight.shape
    assert Cw == C, "channel mismatch"
    if stride != 1:
        # TODO(synk): strided output requires lane subsampling inside the kernel.
        raise NotImplementedError("only stride=1 is implemented (module default)")

    pad_l = (ks - 1) // 2 if pad_zero else 0
    # output length for stride=1 is L in both padding branches

    # Tap-major weight layout: w2[f, k*C + c] = weight[f, c, k]; fed to the MXU unsliced.
    w2 = jnp.transpose(weight, (0, 2, 1)).reshape(F, ks * C).astype(x.dtype)
    has_bias = bias is not None

    itemsize = jnp.dtype(x.dtype).itemsize
    vmem_limit = min(_vmem_capacity_bytes() * 3 // 4, 96 * 1024 * 1024)
    TB, TF = _pick_tiles(N, C, L, F, ks, itemsize, budget=vmem_limit // 2)
    grid = (N // TB, F // TF)

    in_specs = [
        pl.BlockSpec((TB, C, L), lambda n, f: (n, 0, 0)),     # TB input rows per step
        pl.BlockSpec((TF, ks * C), lambda n, f: (f, 0)),      # filter tile (batch-invariant)
    ]
    operands = [x, w2]
    if has_bias:
        in_specs.append(pl.BlockSpec((TF, 1), lambda n, f: (f, 0)))
        operands.append(bias.astype(jnp.float32).reshape(F, 1))

    kernel = functools.partial(_conv1d_kernel, L=L, ks=ks, pad_l=pad_l,
                               pad_zero=pad_zero, has_bias=has_bias)

    return pl.pallas_call(
        kernel,
        out_shape=jax.ShapeDtypeStruct((N, F, L), x.dtype),
        grid=grid,
        in_specs=in_specs,
        out_specs=pl.BlockSpec((TB, TF, L), lambda n, f: (n, f, 0)),
        compiler_params=pltpu.CompilerParams(
            # batch axis "parallel": megacore (v7x) splits batches, never duplicating x DMAs;
            # filter axis "arbitrary".
            dimension_semantics=("parallel", "arbitrary"),
            vmem_limit_bytes=vmem_limit,
        ),
    )(*operands)


# --------------------------------------------------------------------------------------
# Pure-JAX reference mirroring the PyTorch module
# --------------------------------------------------------------------------------------
def _reference(x, weight, bias=None, *, pad_zero=True):
    F_, C, ks = weight.shape
    dn = ('NCH', 'OIH', 'NCH')
    if pad_zero:
        xin, pad = x, [((ks - 1) // 2, ks // 2)]
    else:
        xin = jnp.pad(x, ((0, 0), (0, 0), (0, ks - 1)), mode='edge')
        pad = [(0, 0)]
    y = lax.conv_general_dilated(xin, weight, window_strides=(1,), padding=pad,
                                 dimension_numbers=dn, precision=lax.Precision.HIGHEST)
    if bias is not None:
        y = y + bias.reshape(1, F_, 1)
    return y


if __name__ == "__main__":
    keys = jax.random.split(jax.random.PRNGKey(0), 10)

    def check(N, ni, nf, L, ks, pad_zero, use_bias, kx, kw, kb):
        x = jax.random.normal(kx, (N, ni, L), dtype=jnp.float32)
        w = jax.random.normal(kw, (nf, ni, ks), dtype=jnp.float32) * 0.3
        b = (jax.random.normal(kb, (nf,), dtype=jnp.float32) * 0.1) if use_bias else None
        out = jax.block_until_ready(conv1d_new_padding(x, w, b, pad_zero=pad_zero))
        ref = _reference(x, w, b, pad_zero=pad_zero)
        assert out.shape == (N, nf, L)
        np.testing.assert_allclose(np.asarray(out), np.asarray(ref), rtol=1e-4, atol=1e-4)

    # module defaults at small shapes: odd ks, zero padding, no bias
    check(2, 4, 8, 16, 3, True, False, keys[0], keys[1], keys[2])
    # even ks -> asymmetric zero padding ((ks-1)//2 left, ks//2 right)
    check(2, 4, 8, 16, 4, True, False, keys[0], keys[3], keys[4])
    # replication padding branch, with bias
    check(2, 4, 8, 16, 5, False, True, keys[0], keys[5], keys[6])
    # larger, lane-dense case exercising batch tiling (TB=8 -> grid (2, 1))
    check(16, 8, 16, 128, 3, True, False, keys[7], keys[8], keys[9])

    print("KERNEL_OK")
</pallas_src>

<mosaic_0001>
module attributes {stable_mosaic.version = 11 : i64} {
  func.func @_conv1d_kernel(%arg0: i32, %arg1: i32, %arg2: memref<2x4x16xf32, #tpu.memory_space<vmem>>, %arg3: memref<8x12xf32, #tpu.memory_space<vmem>>, %arg4: memref<2x8x16xf32, #tpu.memory_space<vmem>>) attributes {dimension_semantics = [#tpu.dimension_semantics<parallel>, #tpu.dimension_semantics<arbitrary>], iteration_bounds = array<i64: 1, 1>, scalar_prefetch = 0 : i64, scratch_operands = 0 : i64, tpu.core_type = #tpu.core_type<tc>, window_params = [{transform_indices = @transform_0, window_bounds = array<i64: 2, 4, 16>}, {transform_indices = @transform_1, window_bounds = array<i64: 8, 12>}, {transform_indices = @transform_2, window_bounds = array<i64: 2, 8, 16>}]} {
    %c0 = arith.constant 0 : index
    %c0_0 = arith.constant 0 : index
    %0 = vector.load %arg3[%c0, %c0_0] : memref<8x12xf32, #tpu.memory_space<vmem>>, vector<8x12xf32>
    %c0_1 = arith.constant 0 : index
    %c0_2 = arith.constant 0 : index
    %c0_3 = arith.constant 0 : index
    %1 = vector.load %arg2[%c0_1, %c0_2, %c0_3] : memref<2x4x16xf32, #tpu.memory_space<vmem>>, vector<1x4x16xf32>
    %2 = vector.shape_cast %1 : vector<1x4x16xf32> to vector<4x16xf32>
    %cst = arith.constant 0.000000e+00 : f32
    %3 = vector.broadcast %cst : f32 to vector<4x1xf32>
    %4 = vector.extract_strided_slice %2 {offsets = [0, 0], sizes = [4, 15], strides = [1, 1]} : vector<4x16xf32> to vector<4x15xf32>
    %5 = tpu.concatenate %3, %4 in 1 : vector<4x1xf32>, vector<4x15xf32> -> vector<4x16xf32>
    %cst_4 = arith.constant 0.000000e+00 : f32
    %6 = vector.broadcast %cst_4 : f32 to vector<4x1xf32>
    %7 = vector.extract_strided_slice %2 {offsets = [0, 1], sizes = [4, 15], strides = [1, 1]} : vector<4x16xf32> to vector<4x15xf32>
    %8 = tpu.concatenate %7, %6 in 1 : vector<4x15xf32>, vector<4x1xf32> -> vector<4x16xf32>
    %9 = tpu.concatenate %5, %2, %8 in 0 : vector<4x16xf32>, vector<4x16xf32>, vector<4x16xf32> -> vector<12x16xf32>
    %cst_5 = arith.constant dense<0.000000e+00> : vector<8x16xf32>
    %10 = tpu.matmul %0, %9, %cst_5 {dimension_numbers = #tpu.dot_dimension_numbers<[1], [0], [0], [1], [0, 0, 1, 1], [], []>} : vector<8x12xf32>, vector<12x16xf32>, vector<8x16xf32> -> vector<8x16xf32>
    %c0_6 = arith.constant 0 : index
    %c0_7 = arith.constant 0 : index
    %c0_8 = arith.constant 0 : index
    %11 = vector.load %arg4[%c0_6, %c0_7, %c0_8] : memref<2x8x16xf32, #tpu.memory_space<vmem>>, vector<1x8x16xf32>
    %12 = vector.shape_cast %11 : vector<1x8x16xf32> to vector<8x16xf32>
    %13 = vector.shape_cast %10 : vector<8x16xf32> to vector<1x8x16xf32>
    tpu.vector_store %arg4[%c0_6, %c0_7, %c0_8], %13 {strides = array<i32>} : memref<2x8x16xf32, #tpu.memory_space<vmem>>, vector<1x8x16xf32>,
    %c1 = arith.constant 1 : index
    %c0_9 = arith.constant 0 : index
    %c0_10 = arith.constant 0 : index
    %14 = vector.load %arg2[%c1, %c0_9, %c0_10] : memref<2x4x16xf32, #tpu.memory_space<vmem>>, vector<1x4x16xf32>
    %15 = vector.shape_cast %14 : vector<1x4x16xf32> to vector<4x16xf32>
    %cst_11 = arith.constant 0.000000e+00 : f32
    %16 = vector.broadcast %cst_11 : f32 to vector<4x1xf32>
    %17 = vector.extract_strided_slice %15 {offsets = [0, 0], sizes = [4, 15], strides = [1, 1]} : vector<4x16xf32> to vector<4x15xf32>
    %18 = tpu.concatenate %16, %17 in 1 : vector<4x1xf32>, vector<4x15xf32> -> vector<4x16xf32>
    %cst_12 = arith.constant 0.000000e+00 : f32
    %19 = vector.broadcast %cst_12 : f32 to vector<4x1xf32>
    %20 = vector.extract_strided_slice %15 {offsets = [0, 1], sizes = [4, 15], strides = [1, 1]} : vector<4x16xf32> to vector<4x15xf32>
    %21 = tpu.concatenate %20, %19 in 1 : vector<4x15xf32>, vector<4x1xf32> -> vector<4x16xf32>
    %22 = tpu.concatenate %18, %15, %21 in 0 : vector<4x16xf32>, vector<4x16xf32>, vector<4x16xf32> -> vector<12x16xf32>
    %cst_13 = arith.constant dense<0.000000e+00> : vector<8x16xf32>
    %23 = tpu.matmul %0, %22, %cst_13 {dimension_numbers = #tpu.dot_dimension_numbers<[1], [0], [0], [1], [0, 0, 1, 1], [], []>} : vector<8x12xf32>, vector<12x16xf32>, vector<8x16xf32> -> vector<8x16xf32>
    %c1_14 = arith.constant 1 : index
    %c0_15 = arith.constant 0 : index
    %c0_16 = arith.constant 0 : index
    %24 = vector.load %arg4[%c1_14, %c0_15, %c0_16] : memref<2x8x16xf32, #tpu.memory_space<vmem>>, vector<1x8x16xf32>
    %25 = vector.shape_cast %24 : vector<1x8x16xf32> to vector<8x16xf32>
    %26 = vector.shape_cast %23 : vector<8x16xf32> to vector<1x8x16xf32>
    tpu.vector_store %arg4[%c1_14, %c0_15, %c0_16], %26 {strides = array<i32>} : memref<2x8x16xf32, #tpu.memory_space<vmem>>, vector<1x8x16xf32>,
    return
  }
  func.func @transform_0(%arg0: i32, %arg1: i32) -> (i32, i32, i32) {
    %c0_i32 = arith.constant 0 : i32
    %c0_i32_0 = arith.constant 0 : i32
    %c0_i32_1 = arith.constant 0 : i32
    return %arg0, %c0_i32, %c0_i32_0 : i32, i32, i32
  }
  func.func @transform_1(%arg0: i32, %arg1: i32) -> (i32, i32) {
    %c0_i32 = arith.constant 0 : i32
    %c0_i32_0 = arith.constant 0 : i32
    return %arg1, %c0_i32 : i32, i32
  }
  func.func @transform_2(%arg0: i32, %arg1: i32) -> (i32, i32, i32) {
    %c0_i32 = arith.constant 0 : i32
    %c0_i32_0 = arith.constant 0 : i32
    return %arg0, %arg1, %c0_i32 : i32, i32, i32
  }
}

</mosaic_0001>

<llo_original>
// kernel: tpu_custom_call.1
$region0: #{tpu_custom_call.1}
  #allocation0 [shape = 'u32[]', space=smem, size = 0x4, offset = 0x4, fixed_abs, tag = 'smem constant byte address 0x4 - core index']
  #allocation1 [shape = 'u32[144,128]{1,0:T(1,128)}', space=vmem, size = 0x12000, scoped, tag = 'internal scratch']
  %s0 = inlined_call_operand.hbm [shape: f32[2,4,16], index: 0, kind: input, shape index: {}]
  %s1 = inlined_call_operand.hbm [shape: f32[8,12], index: 1, kind: input, shape index: {}]
  %s2 = inlined_call_operand.hbm [shape: f32[2,8,16], index: 2, kind: output, shape index: {}]
  %s3 = sld [smem:[#allocation0]]
  $region26: #{tpu_custom_call.1} parent=0
    _
  %s5 = ssub.s32 1, %s3
  %s6 = scalar_select 0, %s5, %s3
  $region1: #{tpu_custom_call.1} parent=0
    #allocation2 [shape = 'u8[4096]{0}', space=vmem, size = 0x1000, scoped, tag = 'input window, operand 0, single buffered']
    #allocation3 [shape = 's32[1]{0}', space=sflag, size = 0x4, scoped, tag = 'scoped memory for tpu_custom_call.1']
    #allocation4 [shape = 's32[1]{0}', space=sflag, size = 0x4, scoped, tag = 'scoped memory for tpu_custom_call.1']
    #allocation5 [shape = 'u8[4096]{0}', space=vmem, size = 0x1000, scoped, tag = 'input window, operand 1, single buffered']
    #allocation6 [shape = 's32[1]{0}', space=sflag, size = 0x4, scoped, tag = 'scoped memory for tpu_custom_call.1']
    #allocation7 [shape = 'u8[8192]{0}', space=vmem, size = 0x2000, scoped, tag = 'output window, operand 0, single buffered']
    %7 = vsyncpa [#allocation3], 0
    %8 = vsyncpa [#allocation6], 0
    %9 = vsyncpa [#allocation4], 0
    // Predicated region
    $region2: #{tpu_custom_call.1} parent=1 // pred_check
      _
    $region3: #{tpu_custom_call.1} parent=1 // pred_check_branch
      %11 = sbr.rel (0) target = $region5
    $region4: #{tpu_custom_call.1} parent=1 // pred_region
      %s13 = ssub.s32 128, 128
      %14 = vsyncadd [#allocation3], %s13
      %s15 = sshll.u32 [#allocation2], 4
      %s16 = int_to_ptr.vmem [resolvable:$true] %s15
      %21 = dma.hbm_to_vmem [thread:$0]  %s0, 128, %s16, [#allocation3], 64, 64, 4
    $region5: #{tpu_custom_call.1} parent=1 // pred_fallthru
      _
    // Predicated region
    $region6: #{tpu_custom_call.1} parent=1 // pred_check
      _
    $region7: #{tpu_custom_call.1} parent=1 // pred_check_branch
      %23 = sbr.rel (0) target = $region9
    $region8: #{tpu_custom_call.1} parent=1 // pred_region
      %s25 = ssub.s32 128, 128
      %26 = vsyncadd [#allocation6], %s25
      %s28 = sshll.u32 [#allocation5], 4
      %s29 = int_to_ptr.vmem [resolvable:$true] %s28
      %31 = dma.hbm_to_vmem [thread:$0]  %s1, 128, %s29, [#allocation6]
    $region9: #{tpu_custom_call.1} parent=1 // pred_fallthru
      _
    // Predicated region
    $region10: #{tpu_custom_call.1} parent=1 // pred_check
      _
    $region11: #{tpu_custom_call.1} parent=1 // pred_check_branch
      %33 = sbr.rel (0) target = $region13
    $region12: #{tpu_custom_call.1} parent=1 // pred_region
      %34 = dma.done [#allocation3], 128
    $region13: #{tpu_custom_call.1} parent=1 // pred_fallthru
      _
    // Predicated region
    $region14: #{tpu_custom_call.1} parent=1 // pred_check
      _
    $region15: #{tpu_custom_call.1} parent=1 // pred_check_branch
      %36 = sbr.rel (0) target = $region17
    $region16: #{tpu_custom_call.1} parent=1 // pred_region
      %37 = dma.done [#allocation6], 128
    $region17: #{tpu_custom_call.1} parent=1 // pred_fallthru
      _
    %v38 = vld [vmem:[#allocation5] sm:$0xff]
    %v39 = vld [vmem:[#allocation2] sm:$0xf]
    %41 = vrot.lane.b32.xlu0 %v39, 1
    %v42 = vpop.permute.xlu0 %41
    %vm44 = vcmask 7168
    %v45 = vsel %vm44, 0.0, %v42
    %46 = vrot.lane.b32.xlu0 %v39, 127
    %v47 = vpop.permute.xlu0 %46
    %vm49 = vcmask 121856
    %v50 = vsel %vm49, %v47, 0.0
    %v51 = vrot.slane %v39, 4
    %vm53 = vcmask 1043456
    %v54 = vsel %vm53, %v45, %v51
    %vm55 = vcmask 97280
    %v57 = vsel %vm55, %v38, 0
    %v60 = vsel %vm53, %v50, 0
    %62 = vmatprep.subr.mxu0 0.0
    %63 = vmatpush1.msra.mxu0 0.0
    %64 = vmatprep.subr.mxu0 0.0
    %65 = vmatpush1.msra.mxu0 0.0
    %66 = vmatprep.subr.mxu0 0.0
    %67 = vmatpush1.msra.mxu0 0.0
    %68 = vmatprep.subr.mxu0 0.0
    %69 = vmatpush1.msra.mxu0 0.0
    %70 = vmatprep.subr.mxu0 0.0
    %71 = vmatpush1.msra.mxu0 0.0
    %72 = vmatprep.subr.mxu0 0.0
    %73 = vmatpush1.msra.mxu0 0.0
    %74 = vmatprep.subr.mxu0 0.0
    %75 = vmatpush1.msra.mxu0 0.0
    %76 = vmatprep.subr.mxu0 0.0
    %77 = vmatpush1.msra.mxu0 0.0
    %78 = vmatprep.subr.mxu0 0.0
    %79 = vmatpush1.msra.mxu0 0.0
    %80 = vmatprep.subr.mxu0 0.0
    %81 = vmatpush1.msra.mxu0 0.0
    %82 = vmatprep.subr.mxu0 0.0
    %83 = vmatpush1.msra.mxu0 0.0
    %84 = vmatprep.subr.mxu0 0.0
    %85 = vmatpush1.msra.mxu0 0.0
    %86 = vmatprep.subr.mxu0 0.0
    %87 = vmatpush1.msra.mxu0 0.0
    %88 = vmatprep.subr.mxu0 0.0
    %89 = vmatpush1.msra.mxu0 0.0
    %90 = vmatprep.subr.mxu0 0.0
    %91 = vmatpush1.msra.mxu0 %v60
    %92 = vmatprep.subr.mxu0 0.0
    %93 = vmatpush1.msra.mxu0 %v54
    %94 = vmatprep.subr.mxu0 0.0
    %95 = vmatpush2.msra.mxu0 0.0
    %96 = vmatprep.subr.mxu0 0.0
    %97 = vmatpush2.msra.mxu0 0.0
    %98 = vmatprep.subr.mxu0 0.0
    %99 = vmatpush2.msra.mxu0 0.0
    %100 = vmatprep.subr.mxu0 0.0
    %101 = vmatpush2.msra.mxu0 0.0
    %102 = vmatprep.subr.mxu0 0.0
    %103 = vmatpush2.msra.mxu0 0.0
    %104 = vmatprep.subr.mxu0 0.0
    %105 = vmatpush2.msra.mxu0 0.0
    %106 = vmatprep.subr.mxu0 0.0
    %107 = vmatpush2.msra.mxu0 0.0
    %108 = vmatprep.subr.mxu0 0.0
    %109 = vmatpush2.msra.mxu0 0.0
    %110 = vmatprep.subr.mxu0 0.0
    %111 = vmatpush2.msra.mxu0 0.0
    %112 = vmatprep.subr.mxu0 0.0
    %113 = vmatpush2.msra.mxu0 0.0
    %114 = vmatprep.subr.mxu0 0.0
    %115 = vmatpush2.msra.mxu0 0.0
    %116 = vmatprep.subr.mxu0 0.0
    %117 = vmatpush2.msra.mxu0 0.0
    %118 = vmatprep.subr.mxu0 0.0
    %119 = vmatpush2.msra.mxu0 0.0
    %120 = vmatprep.subr.mxu0 0.0
    %121 = vmatpush2.msra.mxu0 0.0
    %122 = vmatprep.subr.mxu0 0.0
    %123 = vmatpush2.msra.mxu0 0.0
    %124 = vmatprep.subr.mxu0 0.0
    %125 = vmatpush2.msra.mxu0 0.0
    %126 = vmatprep.mubr.f32.mxu0 0.0
    %127 = vmatmul.mubr.f32.gmra.mxu0 %v57
    %v128 = vpop.f32.mrf.mxu0
    %v129 = vadd.f32 0.0, %v128
    %v130 = vpop.f32.mrf.mxu0
    %131 = vdwg.mxu0
    %vm132 = vcmask 130048
    %133 = vst.msk [vmem:[#allocation7] sm:$0xff] %vm132, %v129
    %s134 = scalar_lea.vmem [#allocation2], 4
    %v135 = vld [vmem:[%s134] sm:$0xf]
    %137 = vrot.lane.b32.xlu0 %v135, 1
    %v138 = vpop.permute.xlu0 %137
    %v140 = vsel %vm44, 0.0, %v138
    %141 = vrot.lane.b32.xlu0 %v135, 127
    %v142 = vpop.permute.xlu0 %141
    %v144 = vsel %vm49, %v142, 0.0
    %v145 = vrot.slane %v135, 4
    %v147 = vsel %vm53, %v140, %v145
    %v149 = vsel %vm53, %v144, 0
    %151 = vmatprep.subr.mxu0 0.0
    %152 = vmatpush1.msra.mxu0 0.0
    %153 = vmatprep.subr.mxu0 0.0
    %154 = vmatpush1.msra.mxu0 0.0
    %155 = vmatprep.subr.mxu0 0.0
    %156 = vmatpush1.msra.mxu0 0.0
    %157 = vmatprep.subr.mxu0 0.0
    %158 = vmatpush1.msra.mxu0 0.0
    %159 = vmatprep.subr.mxu0 0.0
    %160 = vmatpush1.msra.mxu0 0.0
    %161 = vmatprep.subr.mxu0 0.0
    %162 = vmatpush1.msra.mxu0 0.0
    %163 = vmatprep.subr.mxu0 0.0
    %164 = vmatpush1.msra.mxu0 0.0
    %165 = vmatprep.subr.mxu0 0.0
    %166 = vmatpush1.msra.mxu0 0.0
    %167 = vmatprep.subr.mxu0 0.0
    %168 = vmatpush1.msra.mxu0 0.0
    %169 = vmatprep.subr.mxu0 0.0
    %170 = vmatpush1.msra.mxu0 0.0
    %171 = vmatprep.subr.mxu0 0.0
    %172 = vmatpush1.msra.mxu0 0.0
    %173 = vmatprep.subr.mxu0 0.0
    %174 = vmatpush1.msra.mxu0 0.0
    %175 = vmatprep.subr.mxu0 0.0
    %176 = vmatpush1.msra.mxu0 0.0
    %177 = vmatprep.subr.mxu0 0.0
    %178 = vmatpush1.msra.mxu0 0.0
    %179 = vmatprep.subr.mxu0 0.0
    %180 = vmatpush1.msra.mxu0 %v149
    %181 = vmatprep.subr.mxu0 0.0
    %182 = vmatpush1.msra.mxu0 %v147
    %183 = vmatprep.subr.mxu0 0.0
    %184 = vmatpush2.msra.mxu0 0.0
    %185 = vmatprep.subr.mxu0 0.0
    %186 = vmatpush2.msra.mxu0 0.0
    %187 = vmatprep.subr.mxu0 0.0
    %188 = vmatpush2.msra.mxu0 0.0
    %189 = vmatprep.subr.mxu0 0.0
    %190 = vmatpush2.msra.mxu0 0.0
    %191 = vmatprep.subr.mxu0 0.0
    %192 = vmatpush2.msra.mxu0 0.0
    %193 = vmatprep.subr.mxu0 0.0
    %194 = vmatpush2.msra.mxu0 0.0
    %195 = vmatprep.subr.mxu0 0.0
    %196 = vmatpush2.msra.mxu0 0.0
    %197 = vmatprep.subr.mxu0 0.0
    %198 = vmatpush2.msra.mxu0 0.0
    %199 = vmatprep.subr.mxu0 0.0
    %200 = vmatpush2.msra.mxu0 0.0
    %201 = vmatprep.subr.mxu0 0.0
    %202 = vmatpush2.msra.mxu0 0.0
    %203 = vmatprep.subr.mxu0 0.0
    %204 = vmatpush2.msra.mxu0 0.0
    %205 = vmatprep.subr.mxu0 0.0
    %206 = vmatpush2.msra.mxu0 0.0
    %207 = vmatprep.subr.mxu0 0.0
    %208 = vmatpush2.msra.mxu0 0.0
    %209 = vmatprep.subr.mxu0 0.0
    %210 = vmatpush2.msra.mxu0 0.0
    %211 = vmatprep.subr.mxu0 0.0
    %212 = vmatpush2.msra.mxu0 0.0
    %213 = vmatprep.subr.mxu0 0.0
    %214 = vmatpush2.msra.mxu0 0.0
    %215 = vmatprep.mubr.f32.mxu0 0.0
    %216 = vmatmul.mubr.f32.gmra.mxu0 %v57
    %v217 = vpop.f32.mrf.mxu0
    %v218 = vadd.f32 0.0, %v217
    %v219 = vpop.f32.mrf.mxu0
    %220 = vdwg.mxu0
    %s221 = scalar_lea.vmem [#allocation7], 8
    %222 = vst.msk [vmem:[%s221] sm:$0xff] %vm132, %v218
    // Predicated region
    $region18: #{tpu_custom_call.1} parent=1 // pred_check
      _
    $region19: #{tpu_custom_call.1} parent=1 // pred_check_branch
      %224 = sbr.rel (0) target = $region21
    $region20: #{tpu_custom_call.1} parent=1 // pred_region
      %s226 = ssub.s32 256, 256
      %227 = vsyncadd [#allocation4], %s226
      %s228 = sshll.u32 [#allocation7], 4
      %s229 = int_to_ptr.vmem [resolvable:$true] %s228
      %234 = dma.vmem_to_hbm [thread:$0]  %s229, 256, %s2, [#allocation4], 128, 128, 8
    $region21: #{tpu_custom_call.1} parent=1 // pred_fallthru
      _
    // Predicated region
    $region22: #{tpu_custom_call.1} parent=1 // pred_check
      _
    $region23: #{tpu_custom_call.1} parent=1 // pred_check_branch
      %236 = sbr.rel (0) target = $region25
    $region24: #{tpu_custom_call.1} parent=1 // pred_region
      %237 = dma.done [#allocation4], 256
    $region25: #{tpu_custom_call.1} parent=1 // pred_fallthru
      _
    %238 = vsyncpa [#allocation3], 1
    %239 = vsyncpa [#allocation6], 1
    %240 = vsyncpa [#allocation4], 1

</llo_original>
